<compile_context>
chip_gen: v7x
topology: tpu7x:2x2x1
jax: 0.10.0
libtpu: 0.0.40
codegen_flags: <defaults>
</compile_context>

<pallas_src>
import jax
import jax.numpy as jnp
from jax.experimental import pallas as pl
from jax.experimental.pallas import tpu as pltpu

IN_DIM = 28 * 28   # 784
HID_DIM = 64
OUT_DIM = 3


def _round_up(n, m):
    return ((n + m - 1) // m) * m


def encoder_kernel(x_ref, w1_ref, b1_ref, w2_ref, b2_ref, o_ref):
    # x_ref:  (tb, 784) f32 (streamed)      w1_ref: (784, 64) f32 (VMEM-resident)
    # b1_ref: (1, 64)   f32                 w2_ref: (64, 3)   f32
    # b2_ref: (1, 3)    f32                 o_ref:  (tb, 3)   f32
    h = jnp.dot(x_ref[...], w1_ref[...], preferred_element_type=jnp.float32)
    h = jnp.maximum(h + b1_ref[...], 0.0)                  # bias + ReLU in f32
    y = jnp.dot(h, w2_ref[...], preferred_element_type=jnp.float32)
    o_ref[...] = (y + b2_ref[...]).astype(o_ref.dtype)


def encoder_forward(x, w1, b1, w2, b2, *, tb=1024):
    """x: (B, 784) f32; w1: (784, 64); b1: (64,); w2: (64, 3); b2: (3,).
    Returns (B, 3) float32 == ReLU(x @ w1 + b1) @ w2 + b2."""
    B, D = x.shape
    assert D == IN_DIM

    # Batch tile: multiple of 8 sublanes, capped by `tb`, and capped at ~ceil(B/2)
    # so the 'parallel' grid has >= 2 steps whenever B allows it (v7x megacore).
    tb_eff = max(8, min(tb, _round_up(B, 8), _round_up(-(-B // 2), 8)))
    n_steps = -(-B // tb_eff)                 # cdiv: partial last block is masked
    grid = (n_steps,)

    b1_2d = b1.reshape(1, HID_DIM).astype(jnp.float32)
    b2_2d = b2.reshape(1, OUT_DIM).astype(jnp.float32)

    flops = 2 * B * (IN_DIM * HID_DIM + HID_DIM * OUT_DIM)
    bytes_accessed = (B * IN_DIM * 4                      # x (f32, read once)
                      + IN_DIM * HID_DIM * 4              # W1
                      + HID_DIM * OUT_DIM * 4             # W2
                      + (HID_DIM + OUT_DIM) * 4           # biases
                      + B * OUT_DIM * 4)                  # output (narrow, f32)

    out = pl.pallas_call(
        encoder_kernel,
        out_shape=jax.ShapeDtypeStruct((B, OUT_DIM), jnp.float32),
        grid_spec=pltpu.PrefetchScalarGridSpec(
            num_scalar_prefetch=0,
            grid=grid,
            in_specs=[
                pl.BlockSpec((tb_eff, IN_DIM), lambda i: (i, 0)),   # x tile (streamed)
                pl.BlockSpec((IN_DIM, HID_DIM), lambda i: (0, 0)),  # W1 (resident)
                pl.BlockSpec((1, HID_DIM), lambda i: (0, 0)),       # b1
                pl.BlockSpec((HID_DIM, OUT_DIM), lambda i: (0, 0)), # W2
                pl.BlockSpec((1, OUT_DIM), lambda i: (0, 0)),       # b2
            ],
            out_specs=pl.BlockSpec((tb_eff, OUT_DIM), lambda i: (i, 0)),
        ),
        compiler_params=pltpu.CompilerParams(
            dimension_semantics=("parallel",),
        ),
        cost_estimate=pl.CostEstimate(
            flops=flops, transcendentals=0, bytes_accessed=bytes_accessed),
    )(x, w1, b1_2d, w2, b2_2d)

    return out


def encoder_ref(x, w1, b1, w2, b2):
    h = jnp.maximum(x @ w1 + b1.reshape(1, -1), 0.0)
    return h @ w2 + b2.reshape(1, -1)


if __name__ == "__main__":
    key = jax.random.PRNGKey(0)
    kx, k1, kb1, k2, kb2 = jax.random.split(key, 5)

    # Deterministic parameter init (Kaiming-uniform-like scale, as nn.Linear default).
    bound1 = 1.0 / jnp.sqrt(IN_DIM)
    w1 = jax.random.uniform(k1, (IN_DIM, HID_DIM), jnp.float32, -bound1, bound1)
    b1 = jax.random.uniform(kb1, (HID_DIM,), jnp.float32, -bound1, bound1)
    bound2 = 1.0 / jnp.sqrt(HID_DIM)
    w2 = jax.random.uniform(k2, (HID_DIM, OUT_DIM), jnp.float32, -bound2, bound2)
    b2 = jax.random.uniform(kb2, (OUT_DIM,), jnp.float32, -bound2, bound2)

    ok = True
    # Small batch (per spec), a ragged batch, and a multi-tile batch.
    for B in (2, 37, 256):
        x = jax.random.normal(kx, (B, IN_DIM), dtype=jnp.float32)
        out = jax.block_until_ready(encoder_forward(x, w1, b1, w2, b2))
        ref = encoder_ref(x, w1, b1, w2, b2)
        assert out.shape == (B, OUT_DIM)
        # MXU default-precision f32 matmul may round intermediates -> loose-ish tol.
        ok = ok and bool(jnp.allclose(out, ref, atol=2e-2, rtol=2e-2))

    assert ok
    print("KERNEL_OK")
</pallas_src>

<mosaic_0001>
module attributes {stable_mosaic.version = 11 : i64} {
  func.func @encoder_kernel(%arg0: i32, %arg1: memref<8x784xf32, #tpu.memory_space<vmem>>, %arg2: memref<784x64xf32, #tpu.memory_space<vmem>>, %arg3: memref<1x64xf32, #tpu.memory_space<vmem>>, %arg4: memref<64x3xf32, #tpu.memory_space<vmem>>, %arg5: memref<1x3xf32, #tpu.memory_space<vmem>>, %arg6: memref<8x3xf32, #tpu.memory_space<vmem>>) attributes {dimension_semantics = [#tpu.dimension_semantics<parallel>], iteration_bounds = array<i64: 1>, scalar_prefetch = 0 : i64, scratch_operands = 0 : i64, tpu.core_type = #tpu.core_type<tc>, window_params = [{transform_indices = @transform_0, window_bounds = array<i64: 8, 784>}, {pipeline_mode = #tpu.pipeline_mode<synchronous>, transform_indices = @transform_1, window_bounds = array<i64: 784, 64>}, {pipeline_mode = #tpu.pipeline_mode<synchronous>, transform_indices = @transform_2, window_bounds = array<i64: 1, 64>}, {pipeline_mode = #tpu.pipeline_mode<synchronous>, transform_indices = @transform_3, window_bounds = array<i64: 64, 3>}, {pipeline_mode = #tpu.pipeline_mode<synchronous>, transform_indices = @transform_4, window_bounds = array<i64: 1, 3>}, {transform_indices = @transform_5, window_bounds = array<i64: 8, 3>}]} {
    %c0 = arith.constant 0 : index
    %c0_0 = arith.constant 0 : index
    %0 = vector.load %arg1[%c0, %c0_0] : memref<8x784xf32, #tpu.memory_space<vmem>>, vector<8x784xf32>
    %c0_1 = arith.constant 0 : index
    %c0_2 = arith.constant 0 : index
    %1 = vector.load %arg2[%c0_1, %c0_2] : memref<784x64xf32, #tpu.memory_space<vmem>>, vector<784x64xf32>
    %cst = arith.constant dense<0.000000e+00> : vector<8x64xf32>
    %2 = tpu.matmul %0, %1, %cst {dimension_numbers = #tpu.dot_dimension_numbers<[1], [0], [0], [1], [0, 0, 1, 1], [], []>} : vector<8x784xf32>, vector<784x64xf32>, vector<8x64xf32> -> vector<8x64xf32>
    %c0_3 = arith.constant 0 : index
    %c0_4 = arith.constant 0 : index
    %3 = vector.load %arg3[%c0_3, %c0_4] : memref<1x64xf32, #tpu.memory_space<vmem>>, vector<1x64xf32>
    %4 = vector.broadcast %3 : vector<1x64xf32> to vector<8x64xf32>
    %5 = arith.addf %2, %4 : vector<8x64xf32>
    %cst_5 = arith.constant 0.000000e+00 : f32
    %6 = vector.broadcast %cst_5 : f32 to vector<8x64xf32>
    %7 = arith.maximumf %5, %6 : vector<8x64xf32>
    %c0_6 = arith.constant 0 : index
    %c0_7 = arith.constant 0 : index
    %8 = vector.load %arg4[%c0_6, %c0_7] : memref<64x3xf32, #tpu.memory_space<vmem>>, vector<64x3xf32>
    %cst_8 = arith.constant dense<0.000000e+00> : vector<8x3xf32>
    %9 = tpu.matmul %7, %8, %cst_8 {dimension_numbers = #tpu.dot_dimension_numbers<[1], [0], [0], [1], [0, 0, 1, 1], [], []>} : vector<8x64xf32>, vector<64x3xf32>, vector<8x3xf32> -> vector<8x3xf32>
    %c0_9 = arith.constant 0 : index
    %c0_10 = arith.constant 0 : index
    %10 = vector.load %arg5[%c0_9, %c0_10] : memref<1x3xf32, #tpu.memory_space<vmem>>, vector<1x3xf32>
    %11 = vector.broadcast %10 : vector<1x3xf32> to vector<8x3xf32>
    %12 = arith.addf %9, %11 : vector<8x3xf32>
    %c0_11 = arith.constant 0 : index
    %c0_12 = arith.constant 0 : index
    %13 = vector.load %arg6[%c0_11, %c0_12] : memref<8x3xf32, #tpu.memory_space<vmem>>, vector<8x3xf32>
    tpu.vector_store %arg6[%c0_11, %c0_12], %12 {strides = array<i32>} : memref<8x3xf32, #tpu.memory_space<vmem>>, vector<8x3xf32>,
    return
  }
  func.func @transform_0(%arg0: i32) -> (i32, i32) {
    %c0_i32 = arith.constant 0 : i32
    %c0_i32_0 = arith.constant 0 : i32
    return %arg0, %c0_i32 : i32, i32
  }
  func.func @transform_1(%arg0: i32) -> (i32, i32) {
    %c0_i32 = arith.constant 0 : i32
    %c0_i32_0 = arith.constant 0 : i32
    %c0_i32_1 = arith.constant 0 : i32
    return %c0_i32, %c0_i32_0 : i32, i32
  }
  func.func @transform_2(%arg0: i32) -> (i32, i32) {
    %c0_i32 = arith.constant 0 : i32
    %c0_i32_0 = arith.constant 0 : i32
    %c0_i32_1 = arith.constant 0 : i32
    return %c0_i32, %c0_i32_0 : i32, i32
  }
  func.func @transform_3(%arg0: i32) -> (i32, i32) {
    %c0_i32 = arith.constant 0 : i32
    %c0_i32_0 = arith.constant 0 : i32
    %c0_i32_1 = arith.constant 0 : i32
    return %c0_i32, %c0_i32_0 : i32, i32
  }
  func.func @transform_4(%arg0: i32) -> (i32, i32) {
    %c0_i32 = arith.constant 0 : i32
    %c0_i32_0 = arith.constant 0 : i32
    %c0_i32_1 = arith.constant 0 : i32
    return %c0_i32, %c0_i32_0 : i32, i32
  }
  func.func @transform_5(%arg0: i32) -> (i32, i32) {
    %c0_i32 = arith.constant 0 : i32
    %c0_i32_0 = arith.constant 0 : i32
    return %arg0, %c0_i32 : i32, i32
  }
}

</mosaic_0001>

<llo_original>
// kernel: tpu_custom_call.1
$region0: #{tpu_custom_call.1}
  #allocation0 [shape = 'u32[]', space=smem, size = 0x4, offset = 0x4, fixed_abs, tag = 'smem constant byte address 0x4 - core index']
  #allocation1 [shape = 'u32[144,128]{1,0:T(1,128)}', space=vmem, size = 0x12000, scoped, tag = 'internal scratch']
  %s0 = inlined_call_operand.vmem [shape: f32[2,784], index: 0, kind: input, shape index: {}]
  %s1 = inlined_call_operand.vmem [shape: f32[784,64], index: 1, kind: input, shape index: {}]
  %s2 = inlined_call_operand.vmem [shape: f32[1,64], index: 2, kind: input, shape index: {}]
  %s3 = inlined_call_operand.vmem [shape: f32[64,3], index: 3, kind: input, shape index: {}]
  %s4 = inlined_call_operand.vmem [shape: f32[1,3], index: 4, kind: input, shape index: {}]
  %s5 = inlined_call_operand.hbm [shape: f32[2,3], index: 5, kind: output, shape index: {}]
  %s6 = sld [smem:[#allocation0]]
  $region30: #{tpu_custom_call.1} parent=0
    _
  %s8 = ssub.s32 1, %s6
  %s9 = scalar_select 0, %s8, %s6
  $region1: #{tpu_custom_call.1} parent=0
    #allocation2 [shape = 'u8[4096]{0}', space=vmem, size = 0x1000, scoped, tag = 'output window, operand 0, single buffered']
    #allocation3 [shape = 's32[1]{0}', space=sflag, size = 0x4, scoped, tag = 'scoped memory for tpu_custom_call.1']
    %10 = vsyncpa [#allocation3], 0
    // Predicated region
    $region2: #{tpu_custom_call.1} parent=1 // pred_check
      _
    $region3: #{tpu_custom_call.1} parent=1 // pred_check_branch
      %12 = sbr.rel (0) target = $region5
    $region4: #{tpu_custom_call.1} parent=1 // pred_region
      _
    $region5: #{tpu_custom_call.1} parent=1 // pred_fallthru
      _
    // Predicated region
    $region6: #{tpu_custom_call.1} parent=1 // pred_check
      _
    $region7: #{tpu_custom_call.1} parent=1 // pred_check_branch
      %14 = sbr.rel (0) target = $region9
    $region8: #{tpu_custom_call.1} parent=1 // pred_region
      _
    $region9: #{tpu_custom_call.1} parent=1 // pred_fallthru
      _
    // Predicated region
    $region10: #{tpu_custom_call.1} parent=1 // pred_check
      _
    $region11: #{tpu_custom_call.1} parent=1 // pred_check_branch
      %16 = sbr.rel (0) target = $region13
    $region12: #{tpu_custom_call.1} parent=1 // pred_region
      _
    $region13: #{tpu_custom_call.1} parent=1 // pred_fallthru
      _
    // Predicated region
    $region14: #{tpu_custom_call.1} parent=1 // pred_check
      _
    $region15: #{tpu_custom_call.1} parent=1 // pred_check_branch
      %18 = sbr.rel (0) target = $region17
    $region16: #{tpu_custom_call.1} parent=1 // pred_region
      _
    $region17: #{tpu_custom_call.1} parent=1 // pred_fallthru
      _
    // Predicated region
    $region18: #{tpu_custom_call.1} parent=1 // pred_check
      _
    $region19: #{tpu_custom_call.1} parent=1 // pred_check_branch
      %20 = sbr.rel (0) target = $region21
    $region20: #{tpu_custom_call.1} parent=1 // pred_region
      _
    $region21: #{tpu_custom_call.1} parent=1 // pred_fallthru
      _
    %v21 = vld [vmem:[%s0] sm:$0xff]
    %v22 = vld [vmem:[%s0 + $0x8] sm:$0x3f]
    %v23 = vld [vmem:[%s0 + $0xe] sm:$0xff]
    %v24 = vld [vmem:[%s0 + $0x16] sm:$0x3f]
    %v25 = vld [vmem:[%s0 + $0x1c] sm:$0xff]
    %v26 = vld [vmem:[%s0 + $0x24] sm:$0x3f]
    %v27 = vld [vmem:[%s0 + $0x2a] sm:$0xff]
    %v28 = vld [vmem:[%s0 + $0x32] sm:$0x3f]
    %v29 = vld [vmem:[%s1] sm:$0xff]
    %v30 = vld [vmem:[%s1 + $0x8] sm:$0xff]
    %v31 = vld [vmem:[%s1 + $0x10] sm:$0xff]
    %v32 = vld [vmem:[%s1 + $0x18] sm:$0xff]
    %v33 = vld [vmem:[%s1 + $0x20] sm:$0xff]
    %v34 = vld [vmem:[%s1 + $0x28] sm:$0xff]
    %v35 = vld [vmem:[%s1 + $0x30] sm:$0xff]
    %v36 = vld [vmem:[%s1 + $0x38] sm:$0xff]
    %v37 = vld [vmem:[%s1 + $0x40] sm:$0xff]
    %v38 = vld [vmem:[%s1 + $0x48] sm:$0xff]
    %v39 = vld [vmem:[%s1 + $0x50] sm:$0xff]
    %v40 = vld [vmem:[%s1 + $0x58] sm:$0xff]
    %v41 = vld [vmem:[%s1 + $0x60] sm:$0xff]
    %v42 = vld [vmem:[%s1 + $0x68] sm:$0xff]
    %v43 = vld [vmem:[%s1 + $0x70] sm:$0xff]
    %v44 = vld [vmem:[%s1 + $0x78] sm:$0xff]
    %v45 = vld [vmem:[%s1 + $0x80] sm:$0xff]
    %v46 = vld [vmem:[%s1 + $0x88] sm:$0xff]
    %v47 = vld [vmem:[%s1 + $0x90] sm:$0xff]
    %v48 = vld [vmem:[%s1 + $0x98] sm:$0xff]
    %v49 = vld [vmem:[%s1 + $0xa0] sm:$0xff]
    %v50 = vld [vmem:[%s1 + $0xa8] sm:$0xff]
    %v51 = vld [vmem:[%s1 + $0xb0] sm:$0xff]
    %v52 = vld [vmem:[%s1 + $0xb8] sm:$0xff]
    %v53 = vld [vmem:[%s1 + $0xc0] sm:$0xff]
    %v54 = vld [vmem:[%s1 + $0xc8] sm:$0xff]
    %v55 = vld [vmem:[%s1 + $0xd0] sm:$0xff]
    %v56 = vld [vmem:[%s1 + $0xd8] sm:$0xff]
    %v57 = vld [vmem:[%s1 + $0xe0] sm:$0xff]
    %v58 = vld [vmem:[%s1 + $0xe8] sm:$0xff]
    %v59 = vld [vmem:[%s1 + $0xf0] sm:$0xff]
    %v60 = vld [vmem:[%s1 + $0xf8] sm:$0xff]
    %v61 = vld [vmem:[%s1 + $0x100] sm:$0xff]
    %v62 = vld [vmem:[%s1 + $0x108] sm:$0xff]
    %v63 = vld [vmem:[%s1 + $0x110] sm:$0xff]
    %v64 = vld [vmem:[%s1 + $0x118] sm:$0xff]
    %v65 = vld [vmem:[%s1 + $0x120] sm:$0xff]
    %v66 = vld [vmem:[%s1 + $0x128] sm:$0xff]
    %v67 = vld [vmem:[%s1 + $0x130] sm:$0xff]
    %v68 = vld [vmem:[%s1 + $0x138] sm:$0xff]
    %v69 = vld [vmem:[%s1 + $0x140] sm:$0xff]
    %v70 = vld [vmem:[%s1 + $0x148] sm:$0xff]
    %v71 = vld [vmem:[%s1 + $0x150] sm:$0xff]
    %v72 = vld [vmem:[%s1 + $0x158] sm:$0xff]
    %v73 = vld [vmem:[%s1 + $0x160] sm:$0xff]
    %v74 = vld [vmem:[%s1 + $0x168] sm:$0xff]
    %v75 = vld [vmem:[%s1 + $0x170] sm:$0xff]
    %v76 = vld [vmem:[%s1 + $0x178] sm:$0xff]
    %v77 = vld [vmem:[%s1 + $0x180] sm:$0xff]
    %v78 = vld [vmem:[%s1 + $0x188] sm:$0xff]
    %v79 = vld [vmem:[%s1 + $0x190] sm:$0xff]
    %v80 = vld [vmem:[%s1 + $0x198] sm:$0xff]
    %v81 = vld [vmem:[%s1 + $0x1a0] sm:$0xff]
    %v82 = vld [vmem:[%s1 + $0x1a8] sm:$0xff]
    %v83 = vld [vmem:[%s1 + $0x1b0] sm:$0xff]
    %v84 = vld [vmem:[%s1 + $0x1b8] sm:$0xff]
    %v85 = vld [vmem:[%s1 + $0x1c0] sm:$0xff]
    %v86 = vld [vmem:[%s1 + $0x1c8] sm:$0xff]
    %v87 = vld [vmem:[%s1 + $0x1d0] sm:$0xff]
    %v88 = vld [vmem:[%s1 + $0x1d8] sm:$0xff]
    %v89 = vld [vmem:[%s1 + $0x1e0] sm:$0xff]
    %v90 = vld [vmem:[%s1 + $0x1e8] sm:$0xff]
    %v91 = vld [vmem:[%s1 + $0x1f0] sm:$0xff]
    %v92 = vld [vmem:[%s1 + $0x1f8] sm:$0xff]
    %v93 = vld [vmem:[%s1 + $0x200] sm:$0xff]
    %v94 = vld [vmem:[%s1 + $0x208] sm:$0xff]
    %v95 = vld [vmem:[%s1 + $0x210] sm:$0xff]
    %v96 = vld [vmem:[%s1 + $0x218] sm:$0xff]
    %v97 = vld [vmem:[%s1 + $0x220] sm:$0xff]
    %v98 = vld [vmem:[%s1 + $0x228] sm:$0xff]
    %v99 = vld [vmem:[%s1 + $0x230] sm:$0xff]
    %v100 = vld [vmem:[%s1 + $0x238] sm:$0xff]
    %v101 = vld [vmem:[%s1 + $0x240] sm:$0xff]
    %v102 = vld [vmem:[%s1 + $0x248] sm:$0xff]
    %v103 = vld [vmem:[%s1 + $0x250] sm:$0xff]
    %v104 = vld [vmem:[%s1 + $0x258] sm:$0xff]
    %v105 = vld [vmem:[%s1 + $0x260] sm:$0xff]
    %v106 = vld [vmem:[%s1 + $0x268] sm:$0xff]
    %v107 = vld [vmem:[%s1 + $0x270] sm:$0xff]
    %v108 = vld [vmem:[%s1 + $0x278] sm:$0xff]
    %v109 = vld [vmem:[%s1 + $0x280] sm:$0xff]
    %v110 = vld [vmem:[%s1 + $0x288] sm:$0xff]
    %v111 = vld [vmem:[%s1 + $0x290] sm:$0xff]
    %v112 = vld [vmem:[%s1 + $0x298] sm:$0xff]
    %v113 = vld [vmem:[%s1 + $0x2a0] sm:$0xff]
    %v114 = vld [vmem:[%s1 + $0x2a8] sm:$0xff]
    %v115 = vld [vmem:[%s1 + $0x2b0] sm:$0xff]
    %v116 = vld [vmem:[%s1 + $0x2b8] sm:$0xff]
    %v117 = vld [vmem:[%s1 + $0x2c0] sm:$0xff]
    %v118 = vld [vmem:[%s1 + $0x2c8] sm:$0xff]
    %v119 = vld [vmem:[%s1 + $0x2d0] sm:$0xff]
    %v120 = vld [vmem:[%s1 + $0x2d8] sm:$0xff]
    %v121 = vld [vmem:[%s1 + $0x2e0] sm:$0xff]
    %v122 = vld [vmem:[%s1 + $0x2e8] sm:$0xff]
    %v123 = vld [vmem:[%s1 + $0x2f0] sm:$0xff]
    %v124 = vld [vmem:[%s1 + $0x2f8] sm:$0xff]
    %v125 = vld [vmem:[%s1 + $0x300] sm:$0xff]
    %v126 = vld [vmem:[%s1 + $0x308] sm:$0xff]
    %v127 = vld [vmem:[%s2] sm:$0x1]
    %v129 = vlaneseq
    %v130 = vshrl.u32 %v129, 7
    %v131 = vsub.s32 0, %v130
    %v132 = vrot.slane %v127, %v131
    %v142 = vcombine.low %v21, %v23
    %v143 = vcombine.high %v21, %v23
    %v144 = vcombine.low %v25, %v27
    %v145 = vcombine.high %v25, %v27
    %v147 = vunpack.c.l.s4 1983009808
    %v148 = vunpack.c.0.s8 %v147
    %v149 = vlaneseq
    %v150 = vshrl.u32 %v149, 7
    %v151 = vsub.s32 %v148, %v150
    %v152 = vrot.slane %v142, %v151
    %v154 = vunpack.c.l.s4 1983009808
    %v155 = vunpack.c.0.s8 %v154
    %v156 = vlaneseq
    %v157 = vshrl.u32 %v156, 7
    %v158 = vsub.s32 %v155, %v157
    %v159 = vrot.slane %v143, %v158
    %v161 = vunpack.c.l.s4 1983009808
    %v162 = vunpack.c.0.s8 %v161
    %v163 = vlaneseq
    %v164 = vshrl.u32 %v163, 7
    %v165 = vsub.s32 %v162, %v164
    %v166 = vrot.slane %v144, %v165
    %v168 = vunpack.c.l.s4 1983009808
    %v169 = vunpack.c.0.s8 %v168
    %v170 = vlaneseq
    %v171 = vshrl.u32 %v170, 7
    %v172 = vsub.s32 %v169, %v171
    %v173 = vrot.slane %v145, %v172
    %v174 = vcombine.low %v152, %v166
    %v175 = vcombine.high %v152, %v166
    %v176 = vcombine.low %v159, %v173
    %v177 = vcombine.high %v159, %v173
    %v178 = vcombine.low %v22, %v24
    %v179 = vcombine.high %v22, %v24
    %v180 = vcombine.low %v26, %v28
    %v181 = vcombine.high %v26, %v28
    %v183 = vunpack.c.l.s4 1983009808
    %v184 = vunpack.c.0.s8 %v183
    %v185 = vlaneseq
    %v186 = vshrl.u32 %v185, 7
    %v187 = vsub.s32 %v184, %v186
    %v188 = vrot.slane %v178, %v187
    %v190 = vunpack.c.l.s4 1983009808
    %v191 = vunpack.c.0.s8 %v190
    %v192 = vlaneseq
    %v193 = vshrl.u32 %v192, 7
    %v194 = vsub.s32 %v191, %v193
    %v195 = vrot.slane %v179, %v194
    %v197 = vunpack.c.l.s4 1983009808
    %v198 = vunpack.c.0.s8 %v197
    %v199 = vlaneseq
    %v200 = vshrl.u32 %v199, 7
    %v201 = vsub.s32 %v198, %v200
    %v202 = vrot.slane %v180, %v201
    %v204 = vunpack.c.l.s4 1983009808
    %v205 = vunpack.c.0.s8 %v204
    %v206 = vlaneseq
    %v207 = vshrl.u32 %v206, 7
    %v208 = vsub.s32 %v205, %v207
    %v209 = vrot.slane %v181, %v208
    %v210 = vcombine.low %v188, %v202
    %v211 = vcombine.high %v188, %v202
    %v212 = vcombine.low %v195, %v209
    %vm219 = vcmask 130048
    %v220 = vsel %vm219, %v212, 0
    %222 = vmatprep.subr.mxu0 0.0
    %223 = vmatpush1.msra.mxu0 %v29
    %224 = vmatprep.subr.mxu0 0.0
    %225 = vmatpush1.msra.mxu0 %v30
    %226 = vmatprep.subr.mxu0 0.0
    %227 = vmatpush1.msra.mxu0 %v31
    %228 = vmatprep.subr.mxu0 0.0
    %229 = vmatpush1.msra.mxu0 %v32
    %230 = vmatprep.subr.mxu0 0.0
    %231 = vmatpush1.msra.mxu0 %v33
    %232 = vmatprep.subr.mxu0 0.0
    %233 = vmatpush1.msra.mxu0 %v34
    %234 = vmatprep.subr.mxu0 0.0
    %235 = vmatpush1.msra.mxu0 %v35
    %236 = vmatprep.subr.mxu0 0.0
    %237 = vmatpush1.msra.mxu0 %v36
    %238 = vmatprep.subr.mxu0 0.0
    %239 = vmatpush1.msra.mxu0 %v37
    %240 = vmatprep.subr.mxu0 0.0
    %241 = vmatpush1.msra.mxu0 %v38
    %242 = vmatprep.subr.mxu0 0.0
    %243 = vmatpush1.msra.mxu0 %v39
    %244 = vmatprep.subr.mxu0 0.0
    %245 = vmatpush1.msra.mxu0 %v40
    %246 = vmatprep.subr.mxu0 0.0
    %247 = vmatpush1.msra.mxu0 %v41
    %248 = vmatprep.subr.mxu0 0.0
    %249 = vmatpush1.msra.mxu0 %v42
    %250 = vmatprep.subr.mxu0 0.0
    %251 = vmatpush1.msra.mxu0 %v43
    %252 = vmatprep.subr.mxu0 0.0
    %253 = vmatpush1.msra.mxu0 %v44
    %254 = vmatprep.subr.mxu0 0.0
    %255 = vmatpush1.msra.mxu0 %v45
    %256 = vmatprep.subr.mxu0 0.0
    %257 = vmatpush1.msra.mxu0 %v46
    %258 = vmatprep.subr.mxu0 0.0
    %259 = vmatpush1.msra.mxu0 %v47
    %260 = vmatprep.subr.mxu0 0.0
    %261 = vmatpush1.msra.mxu0 %v48
    %262 = vmatprep.subr.mxu0 0.0
    %263 = vmatpush1.msra.mxu0 %v49
    %264 = vmatprep.subr.mxu0 0.0
    %265 = vmatpush1.msra.mxu0 %v50
    %266 = vmatprep.subr.mxu0 0.0
    %267 = vmatpush1.msra.mxu0 %v51
    %268 = vmatprep.subr.mxu0 0.0
    %269 = vmatpush1.msra.mxu0 %v52
    %270 = vmatprep.subr.mxu0 0.0
    %271 = vmatpush1.msra.mxu0 %v53
    %272 = vmatprep.subr.mxu0 0.0
    %273 = vmatpush1.msra.mxu0 %v54
    %274 = vmatprep.subr.mxu0 0.0
    %275 = vmatpush1.msra.mxu0 %v55
    %276 = vmatprep.subr.mxu0 0.0
    %277 = vmatpush1.msra.mxu0 %v56
    %278 = vmatprep.subr.mxu0 0.0
    %279 = vmatpush1.msra.mxu0 %v57
    %280 = vmatprep.subr.mxu0 0.0
    %281 = vmatpush1.msra.mxu0 %v58
    %282 = vmatprep.subr.mxu0 0.0
    %283 = vmatpush1.msra.mxu0 %v59
    %284 = vmatprep.subr.mxu0 0.0
    %285 = vmatpush1.msra.mxu0 %v60
    %286 = vmatprep.mubr.f32.mxu0 %v175
    %287 = vmatmul.mubr.f32.gmra.mrb[0].mxu0 %v174
    %v288 = vpop.f32.mrb[0].mxu0
    %v289 = vadd.f32 %v132, %v288
    %v290 = vpop.f32.mrb[0].mxu0
    %291 = vdwg.mxu0
    %292 = vmatprep.subr.mxu0 0.0
    %293 = vmatpush1.msra.mxu0 %v61
    %294 = vmatprep.subr.mxu0 0.0
    %295 = vmatpush1.msra.mxu0 %v62
    %296 = vmatprep.subr.mxu0 0.0
    %297 = vmatpush1.msra.mxu0 %v63
    %298 = vmatprep.subr.mxu0 0.0
    %299 = vmatpush1.msra.mxu0 %v64
    %300 = vmatprep.subr.mxu0 0.0
    %301 = vmatpush1.msra.mxu0 %v65
    %302 = vmatprep.subr.mxu0 0.0
    %303 = vmatpush1.msra.mxu0 %v66
    %304 = vmatprep.subr.mxu0 0.0
    %305 = vmatpush1.msra.mxu0 %v67
    %306 = vmatprep.subr.mxu0 0.0
    %307 = vmatpush1.msra.mxu0 %v68
    %308 = vmatprep.subr.mxu0 0.0
    %309 = vmatpush1.msra.mxu0 %v69
    %310 = vmatprep.subr.mxu0 0.0
    %311 = vmatpush1.msra.mxu0 %v70
    %312 = vmatprep.subr.mxu0 0.0
    %313 = vmatpush1.msra.mxu0 %v71
    %314 = vmatprep.subr.mxu0 0.0
    %315 = vmatpush1.msra.mxu0 %v72
    %316 = vmatprep.subr.mxu0 0.0
    %317 = vmatpush1.msra.mxu0 %v73
    %318 = vmatprep.subr.mxu0 0.0
    %319 = vmatpush1.msra.mxu0 %v74
    %320 = vmatprep.subr.mxu0 0.0
    %321 = vmatpush1.msra.mxu0 %v75
    %322 = vmatprep.subr.mxu0 0.0
    %323 = vmatpush1.msra.mxu0 %v76
    %324 = vmatprep.subr.mxu0 0.0
    %325 = vmatpush1.msra.mxu0 %v77
    %326 = vmatprep.subr.mxu0 0.0
    %327 = vmatpush1.msra.mxu0 %v78
    %328 = vmatprep.subr.mxu0 0.0
    %329 = vmatpush1.msra.mxu0 %v79
    %330 = vmatprep.subr.mxu0 0.0
    %331 = vmatpush1.msra.mxu0 %v80
    %332 = vmatprep.subr.mxu0 0.0
    %333 = vmatpush1.msra.mxu0 %v81
    %334 = vmatprep.subr.mxu0 0.0
    %335 = vmatpush1.msra.mxu0 %v82
    %336 = vmatprep.subr.mxu0 0.0
    %337 = vmatpush1.msra.mxu0 %v83
    %338 = vmatprep.subr.mxu0 0.0
    %339 = vmatpush1.msra.mxu0 %v84
    %340 = vmatprep.subr.mxu0 0.0
    %341 = vmatpush1.msra.mxu0 %v85
    %342 = vmatprep.subr.mxu0 0.0
    %343 = vmatpush1.msra.mxu0 %v86
    %344 = vmatprep.subr.mxu0 0.0
    %345 = vmatpush1.msra.mxu0 %v87
    %346 = vmatprep.subr.mxu0 0.0
    %347 = vmatpush1.msra.mxu0 %v88
    %348 = vmatprep.subr.mxu0 0.0
    %349 = vmatpush1.msra.mxu0 %v89
    %350 = vmatprep.subr.mxu0 0.0
    %351 = vmatpush1.msra.mxu0 %v90
    %352 = vmatprep.subr.mxu0 0.0
    %353 = vmatpush1.msra.mxu0 %v91
    %354 = vmatprep.subr.mxu0 0.0
    %355 = vmatpush1.msra.mxu0 %v92
    %356 = vmatprep.mubr.f32.mxu0 %v177
    %357 = vmatmul.mubr.f32.gmra.mrb[0].mxu0 %v176
    %v358 = vpop.f32.mrb[0].mxu0
    %v359 = vadd.f32 %v289, %v358
    %v360 = vpop.f32.mrb[0].mxu0
    %361 = vdwg.mxu0
    %362 = vmatprep.subr.mxu0 0.0
    %363 = vmatpush1.msra.mxu0 %v93
    %364 = vmatprep.subr.mxu0 0.0
    %365 = vmatpush1.msra.mxu0 %v94
    %366 = vmatprep.subr.mxu0 0.0
    %367 = vmatpush1.msra.mxu0 %v95
    %368 = vmatprep.subr.mxu0 0.0
    %369 = vmatpush1.msra.mxu0 %v96
    %370 = vmatprep.subr.mxu0 0.0
    %371 = vmatpush1.msra.mxu0 %v97
    %372 = vmatprep.subr.mxu0 0.0
    %373 = vmatpush1.msra.mxu0 %v98
    %374 = vmatprep.subr.mxu0 0.0
    %375 = vmatpush1.msra.mxu0 %v99
    %376 = vmatprep.subr.mxu0 0.0
    %377 = vmatpush1.msra.mxu0 %v100
    %378 = vmatprep.subr.mxu0 0.0
    %379 = vmatpush1.msra.mxu0 %v101
    %380 = vmatprep.subr.mxu0 0.0
    %381 = vmatpush1.msra.mxu0 %v102
    %382 = vmatprep.subr.mxu0 0.0
    %383 = vmatpush1.msra.mxu0 %v103
    %384 = vmatprep.subr.mxu0 0.0
    %385 = vmatpush1.msra.mxu0 %v104
    %386 = vmatprep.subr.mxu0 0.0
    %387 = vmatpush1.msra.mxu0 %v105
    %388 = vmatprep.subr.mxu0 0.0
    %389 = vmatpush1.msra.mxu0 %v106
    %390 = vmatprep.subr.mxu0 0.0
    %391 = vmatpush1.msra.mxu0 %v107
    %392 = vmatprep.subr.mxu0 0.0
    %393 = vmatpush1.msra.mxu0 %v108
    %394 = vmatprep.subr.mxu0 0.0
    %395 = vmatpush1.msra.mxu0 %v109
    %396 = vmatprep.subr.mxu0 0.0
    %397 = vmatpush1.msra.mxu0 %v110
    %398 = vmatprep.subr.mxu0 0.0
    %399 = vmatpush1.msra.mxu0 %v111
    %400 = vmatprep.subr.mxu0 0.0
    %401 = vmatpush1.msra.mxu0 %v112
    %402 = vmatprep.subr.mxu0 0.0
    %403 = vmatpush1.msra.mxu0 %v113
    %404 = vmatprep.subr.mxu0 0.0
    %405 = vmatpush1.msra.mxu0 %v114
    %406 = vmatprep.subr.mxu0 0.0
    %407 = vmatpush1.msra.mxu0 %v115
    %408 = vmatprep.subr.mxu0 0.0
    %409 = vmatpush1.msra.mxu0 %v116
    %410 = vmatprep.subr.mxu0 0.0
    %411 = vmatpush1.msra.mxu0 %v117
    %412 = vmatprep.subr.mxu0 0.0
    %413 = vmatpush1.msra.mxu0 %v118
    %414 = vmatprep.subr.mxu0 0.0
    %415 = vmatpush1.msra.mxu0 %v119
    %416 = vmatprep.subr.mxu0 0.0
    %417 = vmatpush1.msra.mxu0 %v120
    %418 = vmatprep.subr.mxu0 0.0
    %419 = vmatpush1.msra.mxu0 %v121
    %420 = vmatprep.subr.mxu0 0.0
    %421 = vmatpush1.msra.mxu0 %v122
    %422 = vmatprep.subr.mxu0 0.0
    %423 = vmatpush1.msra.mxu0 %v123
    %424 = vmatprep.subr.mxu0 0.0
    %425 = vmatpush1.msra.mxu0 %v124
    %426 = vmatprep.mubr.f32.mxu0 %v211
    %427 = vmatmul.mubr.f32.gmra.mrb[0].mxu0 %v210
    %v428 = vpop.f32.mrb[0].mxu0
    %v429 = vadd.f32 %v359, %v428
    %v430 = vpop.f32.mrb[0].mxu0
    %431 = vdwg.mxu0
    %432 = vmatprep.subr.mxu0 0.0
    %433 = vmatpush1.msra.mxu0 %v125
    %434 = vmatprep.subr.mxu0 0.0
    %435 = vmatpush1.msra.mxu0 %v126
    %436 = vmatprep.subr.mxu0 0.0
    %437 = vmatpush1.msra.mxu0 0.0
    %438 = vmatprep.subr.mxu0 0.0
    %439 = vmatpush1.msra.mxu0 0.0
    %440 = vmatprep.subr.mxu0 0.0
    %441 = vmatpush1.msra.mxu0 0.0
    %442 = vmatprep.subr.mxu0 0.0
    %443 = vmatpush1.msra.mxu0 0.0
    %444 = vmatprep.subr.mxu0 0.0
    %445 = vmatpush1.msra.mxu0 0.0
    %446 = vmatprep.subr.mxu0 0.0
    %447 = vmatpush1.msra.mxu0 0.0
    %448 = vmatprep.subr.mxu0 0.0
    %449 = vmatpush1.msra.mxu0 0.0
    %450 = vmatprep.subr.mxu0 0.0
    %451 = vmatpush1.msra.mxu0 0.0
    %452 = vmatprep.subr.mxu0 0.0
    %453 = vmatpush1.msra.mxu0 0.0
    %454 = vmatprep.subr.mxu0 0.0
    %455 = vmatpush1.msra.mxu0 0.0
    %456 = vmatprep.subr.mxu0 0.0
    %457 = vmatpush1.msra.mxu0 0.0
    %458 = vmatprep.subr.mxu0 0.0
    %459 = vmatpush1.msra.mxu0 0.0
    %460 = vmatprep.subr.mxu0 0.0
    %461 = vmatpush1.msra.mxu0 0.0
    %462 = vmatprep.subr.mxu0 0.0
    %463 = vmatpush1.msra.mxu0 0.0
    %464 = vmatprep.subr.mxu0 0.0
    %465 = vmatpush1.msra.mxu0 0.0
    %466 = vmatprep.subr.mxu0 0.0
    %467 = vmatpush1.msra.mxu0 0.0
    %468 = vmatprep.subr.mxu0 0.0
    %469 = vmatpush1.msra.mxu0 0.0
    %470 = vmatprep.subr.mxu0 0.0
    %471 = vmatpush1.msra.mxu0 0.0
    %472 = vmatprep.subr.mxu0 0.0
    %473 = vmatpush1.msra.mxu0 0.0
    %474 = vmatprep.subr.mxu0 0.0
    %475 = vmatpush1.msra.mxu0 0.0
    %476 = vmatprep.subr.mxu0 0.0
    %477 = vmatpush1.msra.mxu0 0.0
    %478 = vmatprep.subr.mxu0 0.0
    %479 = vmatpush1.msra.mxu0 0.0
    %480 = vmatprep.subr.mxu0 0.0
    %481 = vmatpush1.msra.mxu0 0.0
    %482 = vmatprep.subr.mxu0 0.0
    %483 = vmatpush1.msra.mxu0 0.0
    %484 = vmatprep.subr.mxu0 0.0
    %485 = vmatpush1.msra.mxu0 0.0
    %486 = vmatprep.subr.mxu0 0.0
    %487 = vmatpush1.msra.mxu0 0.0
    %488 = vmatprep.subr.mxu0 0.0
    %489 = vmatpush1.msra.mxu0 0.0
    %490 = vmatprep.subr.mxu0 0.0
    %491 = vmatpush1.msra.mxu0 0.0
    %492 = vmatprep.subr.mxu0 0.0
    %493 = vmatpush1.msra.mxu0 0.0
    %494 = vmatprep.subr.mxu0 0.0
    %495 = vmatpush1.msra.mxu0 0.0
    %496 = vmatprep.mubr.f32.mxu0 0.0
    %497 = vmatmul.mubr.f32.gmra.mrb[0].mxu0 %v220
    %v498 = vpop.f32.mrb[0].mxu0
    %v499 = vadd.f32 %v429, %v498
    %v500 = vpop.f32.mrb[0].mxu0
    %501 = vdwg.mxu0
    %v502 = vmax.f32 %v499, 0.0
    %v503 = vld [vmem:[%s3] sm:$0xff]
    %v504 = vld [vmem:[%s3 + $0x8] sm:$0xff]
    %v505 = vld [vmem:[%s3 + $0x10] sm:$0xff]
    %v506 = vld [vmem:[%s3 + $0x18] sm:$0xff]
    %v507 = vld [vmem:[%s3 + $0x20] sm:$0xff]
    %v508 = vld [vmem:[%s3 + $0x28] sm:$0xff]
    %v509 = vld [vmem:[%s3 + $0x30] sm:$0xff]
    %v510 = vld [vmem:[%s3 + $0x38] sm:$0xff]
    %v511 = vld [vmem:[%s4] sm:$0x1]
    %v513 = vlaneseq
    %v514 = vshrl.u32 %v513, 7
    %v515 = vsub.s32 0, %v514
    %v516 = vrot.slane %v511, %v515
    %vm518 = vcmask 523264
    %v520 = vsel %vm518, %v502, 0
    %522 = vmatprep.subr.mxu0 0.0
    %523 = vmatpush1.msra.mxu0 %v503
    %524 = vmatprep.subr.mxu0 0.0
    %525 = vmatpush1.msra.mxu0 %v504
    %526 = vmatprep.subr.mxu0 0.0
    %527 = vmatpush1.msra.mxu0 %v505
    %528 = vmatprep.subr.mxu0 0.0
    %529 = vmatpush1.msra.mxu0 %v506
    %530 = vmatprep.subr.mxu0 0.0
    %531 = vmatpush1.msra.mxu0 %v507
    %532 = vmatprep.subr.mxu0 0.0
    %533 = vmatpush1.msra.mxu0 %v508
    %534 = vmatprep.subr.mxu0 0.0
    %535 = vmatpush1.msra.mxu0 %v509
    %536 = vmatprep.subr.mxu0 0.0
    %537 = vmatpush1.msra.mxu0 %v510
    %538 = vmatprep.subr.mxu0 0.0
    %539 = vmatpush1.msra.mxu0 0.0
    %540 = vmatprep.subr.mxu0 0.0
    %541 = vmatpush1.msra.mxu0 0.0
    %542 = vmatprep.subr.mxu0 0.0
    %543 = vmatpush1.msra.mxu0 0.0
    %544 = vmatprep.subr.mxu0 0.0
    %545 = vmatpush1.msra.mxu0 0.0
    %546 = vmatprep.subr.mxu0 0.0
    %547 = vmatpush1.msra.mxu0 0.0
    %548 = vmatprep.subr.mxu0 0.0
    %549 = vmatpush1.msra.mxu0 0.0
    %550 = vmatprep.subr.mxu0 0.0
    %551 = vmatpush1.msra.mxu0 0.0
    %552 = vmatprep.subr.mxu0 0.0
    %553 = vmatpush1.msra.mxu0 0.0
    %554 = vmatprep.subr.mxu0 0.0
    %555 = vmatpush1.msra.mxu0 0.0
    %556 = vmatprep.subr.mxu0 0.0
    %557 = vmatpush1.msra.mxu0 0.0
    %558 = vmatprep.subr.mxu0 0.0
    %559 = vmatpush1.msra.mxu0 0.0
    %560 = vmatprep.subr.mxu0 0.0
    %561 = vmatpush1.msra.mxu0 0.0
    %562 = vmatprep.subr.mxu0 0.0
    %563 = vmatpush1.msra.mxu0 0.0
    %564 = vmatprep.subr.mxu0 0.0
    %565 = vmatpush1.msra.mxu0 0.0
    %566 = vmatprep.subr.mxu0 0.0
    %567 = vmatpush1.msra.mxu0 0.0
    %568 = vmatprep.subr.mxu0 0.0
    %569 = vmatpush1.msra.mxu0 0.0
    %570 = vmatprep.subr.mxu0 0.0
    %571 = vmatpush1.msra.mxu0 0.0
    %572 = vmatprep.subr.mxu0 0.0
    %573 = vmatpush1.msra.mxu0 0.0
    %574 = vmatprep.subr.mxu0 0.0
    %575 = vmatpush1.msra.mxu0 0.0
    %576 = vmatprep.subr.mxu0 0.0
    %577 = vmatpush1.msra.mxu0 0.0
    %578 = vmatprep.subr.mxu0 0.0
    %579 = vmatpush1.msra.mxu0 0.0
    %580 = vmatprep.subr.mxu0 0.0
    %581 = vmatpush1.msra.mxu0 0.0
    %582 = vmatprep.subr.mxu0 0.0
    %583 = vmatpush1.msra.mxu0 0.0
    %584 = vmatprep.subr.mxu0 0.0
    %585 = vmatpush1.msra.mxu0 0.0
    %586 = vmatprep.mubr.f32.mxu0 0.0
    %587 = vmatmul.mubr.f32.gmra.mrb[0].mxu0 %v520
    %v588 = vpop.f32.mrb[0].mxu0
    %v589 = vadd.f32 %v516, %v588
    %v590 = vpop.f32.mrb[0].mxu0
    %591 = vdwg.mxu0
    %vm592 = vcmask 23552
    %593 = vst.msk [vmem:[#allocation2] sm:$0xff] %vm592, %v589
    // Predicated region
    $region22: #{tpu_custom_call.1} parent=1 // pred_check
      _
    $region23: #{tpu_custom_call.1} parent=1 // pred_check_branch
      %595 = sbr.rel (0) target = $region25
    $region24: #{tpu_custom_call.1} parent=1 // pred_region
      %s597 = ssub.s32 128, 32
      %598 = vsyncadd [#allocation3], %s597
      %s599 = sshll.u32 [#allocation2], 4
      %s600 = int_to_ptr.vmem [resolvable:$true] %s599
      %605 = dma.vmem_to_hbm [thread:$0]  %s600, 32, %s5, [#allocation3], 32, 32, 2
    $region25: #{tpu_custom_call.1} parent=1 // pred_fallthru
      _
    // Predicated region
    $region26: #{tpu_custom_call.1} parent=1 // pred_check
      _
    $region27: #{tpu_custom_call.1} parent=1 // pred_check_branch
      %607 = sbr.rel (0) target = $region29
    $region28: #{tpu_custom_call.1} parent=1 // pred_region
      %608 = dma.done [#allocation3], 128
    $region29: #{tpu_custom_call.1} parent=1 // pred_fallthru
      _
    %609 = vsyncpa [#allocation3], 1

</llo_original>
